<compile_context>
chip_gen: v7x
topology: tpu7x:2x2x1
jax: 0.10.0
libtpu: 0.0.40
codegen_flags: <defaults>
</compile_context>

<pallas_src>
import jax
import jax.numpy as jnp
from jax.experimental import pallas as pl
from jax.experimental.pallas import tpu as pltpu


def mlp_kernel(x_ref, w1_ref, b1_ref, w2_ref, b2_ref,
               w3_ref, b3_ref, w4t_ref, b4_ref, o_ref):
    def dense_relu(h, w_ref, b_ref):
        y = jnp.dot(h.astype(w_ref.dtype), w_ref[...],
                    preferred_element_type=jnp.float32)
        return jnp.maximum(y + b_ref[...], 0.0)          # bias + ReLU in f32 (VPU)

    h = dense_relu(x_ref[...], w1_ref, b1_ref)           # (tb, 256)
    # dropout(p=0.3): identity at inference time
    h = dense_relu(h, w2_ref, b2_ref)                    # (tb, 128)
    # dropout(p=0.3): identity at inference time
    h = dense_relu(h, w3_ref, b3_ref)                    # (tb, 64)
    # layer4 (out_features = 1): contract (1,64) against (tb,64) on dim 1 so
    # the result is a lane-dense (1, tb) row with NO materialized transpose.
    out_row = jax.lax.dot_general(
        w4t_ref[...], h.astype(w4t_ref.dtype),
        dimension_numbers=(((1,), (1,)), ((), ())),
        preferred_element_type=jnp.float32)               # (1, tb)
    o_ref[...] = (out_row + b4_ref[...]).astype(o_ref.dtype)


def _round_up(n, m):
    return -(-n // m) * m


def _choose_tiling(B, cap=2048):
    """Return (tb, padded_B).

    B <= 256      -> single step, tb == B (block == full array dim, always legal).
    256 < B       -> >= 2 grid steps (dual-TC on v7x), tb a multiple of 128,
                     batch padded up to n_steps * tb.
    """
    if B <= 256:
        return B, B
    n_steps = max(2, -(-B // cap))
    tb = _round_up(-(-B // n_steps), 128)
    return tb, n_steps * tb


def linear_regression_forward(x, params, *, tile_cap=2048, use_bf16=True):
    """x: (B, input_dim). params: w1..w4 as (in, out), b1..b3 as (1, out), b4 as (1, 1)."""
    B, D = x.shape
    mxu_dtype = jnp.bfloat16 if use_bf16 else jnp.float32

    tb, Bp = _choose_tiling(B, cap=tile_cap)
    n_tiles = Bp // tb

    x_in = x.astype(mxu_dtype)                            # halve dominant HBM stream
    if Bp != B:
        x_in = jnp.pad(x_in, ((0, Bp - B), (0, 0)))       # zero-pad tail rows

    # Pre-cast weights once (resident in VMEM across grid steps); biases stay f32.
    w1 = params["w1"].astype(mxu_dtype); b1 = params["b1"]
    w2 = params["w2"].astype(mxu_dtype); b2 = params["b2"]
    w3 = params["w3"].astype(mxu_dtype); b3 = params["b3"]
    w4t = params["w4"].T.astype(mxu_dtype); b4 = params["b4"]   # (1, 64), (1, 1)

    resident = lambda a: pl.BlockSpec(a.shape, lambda i: (0, 0))

    out_row = pl.pallas_call(
        mlp_kernel,
        out_shape=jax.ShapeDtypeStruct((1, Bp), jnp.float32),
        grid=(n_tiles,),
        in_specs=[
            pl.BlockSpec((tb, D), lambda i: (i, 0)),      # x tile over batch
            resident(w1), resident(b1),
            resident(w2), resident(b2),
            resident(w3), resident(b3),
            resident(w4t), resident(b4),
        ],
        out_specs=pl.BlockSpec((1, tb), lambda i: (0, i)),  # lane-dense output row
        compiler_params=pltpu.CompilerParams(
            dimension_semantics=("parallel",),
            vmem_limit_bytes=32 * 1024 * 1024),
    )(x_in, w1, b1, w2, b2, w3, b3, w4t, b4)

    return out_row[0, :B].reshape(B, 1)


def init_params(key, input_dim):
    """Deterministic init mimicking nn.Linear's U(-1/sqrt(fan_in), +1/sqrt(fan_in))."""
    dims = [(input_dim, 256), (256, 128), (128, 64), (64, 1)]
    params = {}
    for idx, (fan_in, fan_out) in enumerate(dims, start=1):
        key, kw, kb = jax.random.split(key, 3)
        bound = 1.0 / jnp.sqrt(float(fan_in))
        params[f"w{idx}"] = jax.random.uniform(
            kw, (fan_in, fan_out), jnp.float32, -bound, bound)
        params[f"b{idx}"] = jax.random.uniform(
            kb, (1, fan_out), jnp.float32, -bound, bound)
    return params


def reference_forward(x, params, *, use_bf16=True):
    """Pure-JAX reference using the same precision recipe as the kernel."""
    cd = jnp.bfloat16 if use_bf16 else jnp.float32
    h = x
    for i in (1, 2, 3):
        h = jnp.maximum(
            jnp.dot(h.astype(cd), params[f"w{i}"].astype(cd),
                    preferred_element_type=jnp.float32) + params[f"b{i}"],
            0.0)
    return jnp.dot(h.astype(cd), params["w4"].astype(cd),
                   preferred_element_type=jnp.float32) + params["b4"]


if __name__ == "__main__":
    key = jax.random.PRNGKey(0)
    key, kx1, kx2 = jax.random.split(key, 3)

    input_dim = 32
    params = init_params(key, input_dim)

    # Test 1: small batch -> single grid step (tb == B).
    batch = 16
    x = jax.random.normal(kx1, (batch, input_dim), jnp.float32)
    out = jax.block_until_ready(linear_regression_forward(x, params))
    assert out.shape == (batch, 1)
    ref = reference_forward(x, params)
    err = jnp.max(jnp.abs(out - ref))
    assert jnp.allclose(out, ref, atol=1e-2, rtol=1e-2), f"max abs err {err}"

    # Test 2: awkward batch -> padded, 2 parallel 128-multiple tiles.
    batch2 = 300
    x2 = jax.random.normal(kx2, (batch2, input_dim), jnp.float32)
    out2 = jax.block_until_ready(linear_regression_forward(x2, params))
    assert out2.shape == (batch2, 1)
    ref2 = reference_forward(x2, params)
    err2 = jnp.max(jnp.abs(out2 - ref2))
    assert jnp.allclose(out2, ref2, atol=1e-2, rtol=1e-2), f"max abs err {err2}"

    print("KERNEL_OK")
</pallas_src>

<mosaic_0001>
module attributes {stable_mosaic.version = 11 : i64} {
  func.func @mlp_kernel(%arg0: i32, %arg1: memref<16x32xbf16, #tpu.memory_space<vmem>>, %arg2: memref<32x256xbf16, #tpu.memory_space<vmem>>, %arg3: memref<1x256xf32, #tpu.memory_space<vmem>>, %arg4: memref<256x128xbf16, #tpu.memory_space<vmem>>, %arg5: memref<1x128xf32, #tpu.memory_space<vmem>>, %arg6: memref<128x64xbf16, #tpu.memory_space<vmem>>, %arg7: memref<1x64xf32, #tpu.memory_space<vmem>>, %arg8: memref<1x64xbf16, #tpu.memory_space<vmem>>, %arg9: memref<1x1xf32, #tpu.memory_space<vmem>>, %arg10: memref<1x16xf32, #tpu.memory_space<vmem>>) attributes {dimension_semantics = [#tpu.dimension_semantics<parallel>], iteration_bounds = array<i64: 1>, scalar_prefetch = 0 : i64, scratch_operands = 0 : i64, tpu.core_type = #tpu.core_type<tc>, window_params = [{transform_indices = @transform_0, window_bounds = array<i64: 16, 32>}, {pipeline_mode = #tpu.pipeline_mode<synchronous>, transform_indices = @transform_1, window_bounds = array<i64: 32, 256>}, {pipeline_mode = #tpu.pipeline_mode<synchronous>, transform_indices = @transform_2, window_bounds = array<i64: 1, 256>}, {pipeline_mode = #tpu.pipeline_mode<synchronous>, transform_indices = @transform_3, window_bounds = array<i64: 256, 128>}, {pipeline_mode = #tpu.pipeline_mode<synchronous>, transform_indices = @transform_4, window_bounds = array<i64: 1, 128>}, {pipeline_mode = #tpu.pipeline_mode<synchronous>, transform_indices = @transform_5, window_bounds = array<i64: 128, 64>}, {pipeline_mode = #tpu.pipeline_mode<synchronous>, transform_indices = @transform_6, window_bounds = array<i64: 1, 64>}, {pipeline_mode = #tpu.pipeline_mode<synchronous>, transform_indices = @transform_7, window_bounds = array<i64: 1, 64>}, {pipeline_mode = #tpu.pipeline_mode<synchronous>, transform_indices = @transform_8, window_bounds = array<i64: 1, 1>}, {transform_indices = @transform_9, window_bounds = array<i64: 1, 16>}]} {
    %c0 = arith.constant 0 : index
    %c0_0 = arith.constant 0 : index
    %0 = vector.load %arg1[%c0, %c0_0] : memref<16x32xbf16, #tpu.memory_space<vmem>>, vector<16x32xbf16>
    %c0_1 = arith.constant 0 : index
    %c0_2 = arith.constant 0 : index
    %1 = vector.load %arg2[%c0_1, %c0_2] : memref<32x256xbf16, #tpu.memory_space<vmem>>, vector<32x256xbf16>
    %cst = arith.constant dense<0.000000e+00> : vector<16x256xf32>
    %2 = tpu.matmul %0, %1, %cst {dimension_numbers = #tpu.dot_dimension_numbers<[1], [0], [0], [1], [0, 0, 1, 1], [], []>} : vector<16x32xbf16>, vector<32x256xbf16>, vector<16x256xf32> -> vector<16x256xf32>
    %c0_3 = arith.constant 0 : index
    %c0_4 = arith.constant 0 : index
    %3 = vector.load %arg3[%c0_3, %c0_4] : memref<1x256xf32, #tpu.memory_space<vmem>>, vector<1x256xf32>
    %4 = vector.broadcast %3 : vector<1x256xf32> to vector<16x256xf32>
    %5 = arith.addf %2, %4 : vector<16x256xf32>
    %cst_5 = arith.constant 0.000000e+00 : f32
    %6 = vector.broadcast %cst_5 : f32 to vector<16x256xf32>
    %7 = arith.maximumf %5, %6 : vector<16x256xf32>
    %8 = arith.truncf %7 : vector<16x256xf32> to vector<16x256xbf16>
    %c0_6 = arith.constant 0 : index
    %c0_7 = arith.constant 0 : index
    %9 = vector.load %arg4[%c0_6, %c0_7] : memref<256x128xbf16, #tpu.memory_space<vmem>>, vector<256x128xbf16>
    %cst_8 = arith.constant dense<0.000000e+00> : vector<16x128xf32>
    %10 = tpu.matmul %8, %9, %cst_8 {dimension_numbers = #tpu.dot_dimension_numbers<[1], [0], [0], [1], [0, 0, 1, 1], [], []>} : vector<16x256xbf16>, vector<256x128xbf16>, vector<16x128xf32> -> vector<16x128xf32>
    %c0_9 = arith.constant 0 : index
    %c0_10 = arith.constant 0 : index
    %11 = vector.load %arg5[%c0_9, %c0_10] : memref<1x128xf32, #tpu.memory_space<vmem>>, vector<1x128xf32>
    %12 = vector.broadcast %11 : vector<1x128xf32> to vector<16x128xf32>
    %13 = arith.addf %10, %12 : vector<16x128xf32>
    %cst_11 = arith.constant 0.000000e+00 : f32
    %14 = vector.broadcast %cst_11 : f32 to vector<16x128xf32>
    %15 = arith.maximumf %13, %14 : vector<16x128xf32>
    %16 = arith.truncf %15 : vector<16x128xf32> to vector<16x128xbf16>
    %c0_12 = arith.constant 0 : index
    %c0_13 = arith.constant 0 : index
    %17 = vector.load %arg6[%c0_12, %c0_13] : memref<128x64xbf16, #tpu.memory_space<vmem>>, vector<128x64xbf16>
    %cst_14 = arith.constant dense<0.000000e+00> : vector<16x64xf32>
    %18 = tpu.matmul %16, %17, %cst_14 {dimension_numbers = #tpu.dot_dimension_numbers<[1], [0], [0], [1], [0, 0, 1, 1], [], []>} : vector<16x128xbf16>, vector<128x64xbf16>, vector<16x64xf32> -> vector<16x64xf32>
    %c0_15 = arith.constant 0 : index
    %c0_16 = arith.constant 0 : index
    %19 = vector.load %arg7[%c0_15, %c0_16] : memref<1x64xf32, #tpu.memory_space<vmem>>, vector<1x64xf32>
    %20 = vector.broadcast %19 : vector<1x64xf32> to vector<16x64xf32>
    %21 = arith.addf %18, %20 : vector<16x64xf32>
    %cst_17 = arith.constant 0.000000e+00 : f32
    %22 = vector.broadcast %cst_17 : f32 to vector<16x64xf32>
    %23 = arith.maximumf %21, %22 : vector<16x64xf32>
    %c0_18 = arith.constant 0 : index
    %c0_19 = arith.constant 0 : index
    %24 = vector.load %arg8[%c0_18, %c0_19] : memref<1x64xbf16, #tpu.memory_space<vmem>>, vector<1x64xbf16>
    %25 = arith.truncf %23 : vector<16x64xf32> to vector<16x64xbf16>
    %cst_20 = arith.constant dense<0.000000e+00> : vector<1x16xf32>
    %26 = tpu.matmul %24, %25, %cst_20 {dimension_numbers = #tpu.dot_dimension_numbers<[1], [1], [0], [0], [0, 0, 1, 0], [], []>} : vector<1x64xbf16>, vector<16x64xbf16>, vector<1x16xf32> -> vector<1x16xf32>
    %c0_21 = arith.constant 0 : index
    %c0_22 = arith.constant 0 : index
    %27 = vector.load %arg9[%c0_21, %c0_22] : memref<1x1xf32, #tpu.memory_space<vmem>>, vector<1x1xf32>
    %28 = vector.broadcast %27 : vector<1x1xf32> to vector<1x16xf32>
    %29 = arith.addf %26, %28 : vector<1x16xf32>
    %c0_23 = arith.constant 0 : index
    %c0_24 = arith.constant 0 : index
    %30 = vector.load %arg10[%c0_23, %c0_24] : memref<1x16xf32, #tpu.memory_space<vmem>>, vector<1x16xf32>
    tpu.vector_store %arg10[%c0_23, %c0_24], %29 {strides = array<i32>} : memref<1x16xf32, #tpu.memory_space<vmem>>, vector<1x16xf32>,
    return
  }
  func.func @transform_0(%arg0: i32) -> (i32, i32) {
    %c0_i32 = arith.constant 0 : i32
    %c0_i32_0 = arith.constant 0 : i32
    return %arg0, %c0_i32 : i32, i32
  }
  func.func @transform_1(%arg0: i32) -> (i32, i32) {
    %c0_i32 = arith.constant 0 : i32
    %c0_i32_0 = arith.constant 0 : i32
    %c0_i32_1 = arith.constant 0 : i32
    return %c0_i32, %c0_i32_0 : i32, i32
  }
  func.func @transform_2(%arg0: i32) -> (i32, i32) {
    %c0_i32 = arith.constant 0 : i32
    %c0_i32_0 = arith.constant 0 : i32
    %c0_i32_1 = arith.constant 0 : i32
    return %c0_i32, %c0_i32_0 : i32, i32
  }
  func.func @transform_3(%arg0: i32) -> (i32, i32) {
    %c0_i32 = arith.constant 0 : i32
    %c0_i32_0 = arith.constant 0 : i32
    %c0_i32_1 = arith.constant 0 : i32
    return %c0_i32, %c0_i32_0 : i32, i32
  }
  func.func @transform_4(%arg0: i32) -> (i32, i32) {
    %c0_i32 = arith.constant 0 : i32
    %c0_i32_0 = arith.constant 0 : i32
    %c0_i32_1 = arith.constant 0 : i32
    return %c0_i32, %c0_i32_0 : i32, i32
  }
  func.func @transform_5(%arg0: i32) -> (i32, i32) {
    %c0_i32 = arith.constant 0 : i32
    %c0_i32_0 = arith.constant 0 : i32
    %c0_i32_1 = arith.constant 0 : i32
    return %c0_i32, %c0_i32_0 : i32, i32
  }
  func.func @transform_6(%arg0: i32) -> (i32, i32) {
    %c0_i32 = arith.constant 0 : i32
    %c0_i32_0 = arith.constant 0 : i32
    %c0_i32_1 = arith.constant 0 : i32
    return %c0_i32, %c0_i32_0 : i32, i32
  }
  func.func @transform_7(%arg0: i32) -> (i32, i32) {
    %c0_i32 = arith.constant 0 : i32
    %c0_i32_0 = arith.constant 0 : i32
    %c0_i32_1 = arith.constant 0 : i32
    return %c0_i32, %c0_i32_0 : i32, i32
  }
  func.func @transform_8(%arg0: i32) -> (i32, i32) {
    %c0_i32 = arith.constant 0 : i32
    %c0_i32_0 = arith.constant 0 : i32
    %c0_i32_1 = arith.constant 0 : i32
    return %c0_i32, %c0_i32_0 : i32, i32
  }
  func.func @transform_9(%arg0: i32) -> (i32, i32) {
    %c0_i32 = arith.constant 0 : i32
    %c0_i32_0 = arith.constant 0 : i32
    return %c0_i32, %arg0 : i32, i32
  }
}

</mosaic_0001>

<llo_original>
// kernel: tpu_custom_call.1
$region0: #{tpu_custom_call.1}
  #allocation0 [shape = 'u32[]', space=smem, size = 0x4, offset = 0x4, fixed_abs, tag = 'smem constant byte address 0x4 - core index']
  #allocation1 [shape = 'u32[144,128]{1,0:T(1,128)}', space=vmem, size = 0x12000, scoped, tag = 'internal scratch']
  #allocation2 [shape = 'f32[1,1]{1,0:T(1,128)S(1)}', space=vmem, size = 0x200, scoped, tag = 'scoped memory for tpu_custom_call.1']
  %s0 = inlined_call_operand.vmem [shape: bf16[16,32], index: 0, kind: input, shape index: {}]
  %s1 = inlined_call_operand.vmem [shape: bf16[32,256], index: 1, kind: input, shape index: {}]
  %s2 = inlined_call_operand.vmem [shape: f32[1,256], index: 2, kind: input, shape index: {}]
  %s3 = inlined_call_operand.hbm [shape: bf16[256,128], index: 3, kind: input, shape index: {}]
  %s4 = inlined_call_operand.vmem [shape: f32[1,128], index: 4, kind: input, shape index: {}]
  %s5 = inlined_call_operand.vmem [shape: bf16[128,64], index: 5, kind: input, shape index: {}]
  %s6 = inlined_call_operand.vmem [shape: f32[1,64], index: 6, kind: input, shape index: {}]
  %s7 = inlined_call_operand.vmem [shape: bf16[1,64], index: 7, kind: input, shape index: {}]
  %s8 = inlined_call_operand.<no memory space> [shape: f32[1,1], index: 8, kind: input, shape index: {}]
  %s9 = inlined_call_operand.hbm [shape: f32[1,16], index: 9, kind: output, shape index: {}]
  %s10 = sld [smem:[#allocation0]]
  $region50: #{tpu_custom_call.1} parent=0
    _
  %s12 = ssub.s32 1, %s10
  %s13 = scalar_select 0, %s12, %s10
  %v14 = vstv %s8
  %15 = vst [vmem:[#allocation2] sm:$0x1] %v14
  $region1: #{tpu_custom_call.1} parent=0
    #allocation3 [shape = 'u8[65536]{0}', space=vmem, size = 0x10000, scoped, tag = 'input window, operand 3, single buffered']
    #allocation4 [shape = 's32[1]{0}', space=sflag, size = 0x4, scoped, tag = 'scoped memory for tpu_custom_call.1']
    #allocation5 [shape = 's32[1]{0}', space=sflag, size = 0x4, scoped, tag = 'scoped memory for tpu_custom_call.1']
    #allocation6 [shape = 'u8[512]{0}', space=vmem, size = 0x400, scoped, tag = 'output window, operand 0, single buffered']
    %16 = vsyncpa [#allocation4], 0
    %17 = vsyncpa [#allocation5], 0
    // Predicated region
    $region2: #{tpu_custom_call.1} parent=1 // pred_check
      _
    $region3: #{tpu_custom_call.1} parent=1 // pred_check_branch
      %19 = sbr.rel (0) target = $region5
    $region4: #{tpu_custom_call.1} parent=1 // pred_region
      _
    $region5: #{tpu_custom_call.1} parent=1 // pred_fallthru
      _
    // Predicated region
    $region6: #{tpu_custom_call.1} parent=1 // pred_check
      _
    $region7: #{tpu_custom_call.1} parent=1 // pred_check_branch
      %21 = sbr.rel (0) target = $region9
    $region8: #{tpu_custom_call.1} parent=1 // pred_region
      _
    $region9: #{tpu_custom_call.1} parent=1 // pred_fallthru
      _
    // Predicated region
    $region10: #{tpu_custom_call.1} parent=1 // pred_check
      _
    $region11: #{tpu_custom_call.1} parent=1 // pred_check_branch
      %23 = sbr.rel (0) target = $region13
    $region12: #{tpu_custom_call.1} parent=1 // pred_region
      _
    $region13: #{tpu_custom_call.1} parent=1 // pred_fallthru
      _
    // Predicated region
    $region14: #{tpu_custom_call.1} parent=1 // pred_check
      _
    $region15: #{tpu_custom_call.1} parent=1 // pred_check_branch
      %25 = sbr.rel (0) target = $region17
    $region16: #{tpu_custom_call.1} parent=1 // pred_region
      %s27 = ssub.s32 2048, 2048
      %28 = vsyncadd [#allocation4], %s27
      %s29 = sshll.u32 [#allocation3], 4
      %s30 = int_to_ptr.vmem [resolvable:$true] %s29
      %35 = dma.hbm_to_vmem [thread:$0]  %s3, 2048, %s30, [#allocation4], 64, 64, 4
    $region17: #{tpu_custom_call.1} parent=1 // pred_fallthru
      _
    // Predicated region
    $region18: #{tpu_custom_call.1} parent=1 // pred_check
      _
    $region19: #{tpu_custom_call.1} parent=1 // pred_check_branch
      %37 = sbr.rel (0) target = $region21
    $region20: #{tpu_custom_call.1} parent=1 // pred_region
      _
    $region21: #{tpu_custom_call.1} parent=1 // pred_fallthru
      _
    // Predicated region
    $region22: #{tpu_custom_call.1} parent=1 // pred_check
      _
    $region23: #{tpu_custom_call.1} parent=1 // pred_check_branch
      %39 = sbr.rel (0) target = $region25
    $region24: #{tpu_custom_call.1} parent=1 // pred_region
      _
    $region25: #{tpu_custom_call.1} parent=1 // pred_fallthru
      _
    // Predicated region
    $region26: #{tpu_custom_call.1} parent=1 // pred_check
      _
    $region27: #{tpu_custom_call.1} parent=1 // pred_check_branch
      %41 = sbr.rel (0) target = $region29
    $region28: #{tpu_custom_call.1} parent=1 // pred_region
      _
    $region29: #{tpu_custom_call.1} parent=1 // pred_fallthru
      _
    // Predicated region
    $region30: #{tpu_custom_call.1} parent=1 // pred_check
      _
    $region31: #{tpu_custom_call.1} parent=1 // pred_check_branch
      %43 = sbr.rel (0) target = $region33
    $region32: #{tpu_custom_call.1} parent=1 // pred_region
      _
    $region33: #{tpu_custom_call.1} parent=1 // pred_fallthru
      _
    // Predicated region
    $region34: #{tpu_custom_call.1} parent=1 // pred_check
      _
    $region35: #{tpu_custom_call.1} parent=1 // pred_check_branch
      %45 = sbr.rel (0) target = $region37
    $region36: #{tpu_custom_call.1} parent=1 // pred_region
      _
    $region37: #{tpu_custom_call.1} parent=1 // pred_fallthru
      _
    // Predicated region
    $region38: #{tpu_custom_call.1} parent=1 // pred_check
      _
    $region39: #{tpu_custom_call.1} parent=1 // pred_check_branch
      %47 = sbr.rel (0) target = $region41
    $region40: #{tpu_custom_call.1} parent=1 // pred_region
      %48 = dma.done [#allocation4], 2048
    $region41: #{tpu_custom_call.1} parent=1 // pred_fallthru
      _
    %v50 = vld [vmem:[%s0] sm:$0xf]
    %v51 = vld [vmem:[%s0 + $0x4] sm:$0xf]
    %v52 = vld [vmem:[%s1] sm:$0xff]
    %v53 = vld [vmem:[%s1 + $0x8] sm:$0xff]
    %v54 = vld [vmem:[%s1 + $0x10] sm:$0xff]
    %v55 = vld [vmem:[%s1 + $0x18] sm:$0xff]
    %v56 = vld [vmem:[%s2] sm:$0x3]
    %v58 = vlaneseq
    %v59 = vshrl.u32 %v58, 7
    %v60 = vsub.s32 0, %v59
    %v61 = vrot.slane %v56, %v60
    %v62 = vlaneseq
    %v63 = vshrl.u32 %v62, 7
    %v64 = vsub.s32 1, %v63
    %v65 = vrot.slane %v56, %v64
    %v70 = vunpack.c.l.b16 %v50
    %v71 = vunpack.c.l.b16 %v51
    %v72 = vpack.c.b16 %v71, %v70
    %v77 = vunpack.c.l.b16 %v52
    %v78 = vunpack.c.h.b16 %v52
    %v79 = vunpack.c.l.b16 %v53
    %v80 = vunpack.c.h.b16 %v53
    %v81 = vunpack.c.l.b16 %v54
    %v82 = vunpack.c.h.b16 %v54
    %v83 = vunpack.c.l.b16 %v55
    %v84 = vunpack.c.h.b16 %v55
    %v85 = vpack.c.b16 %v79, %v77
    %v86 = vpack.c.b16 %v80, %v78
    %v87 = vpack.c.b16 %v83, %v81
    %v88 = vpack.c.b16 %v84, %v82
    %vm93 = vcmask 261120
    %v95 = vsel %vm93, %v72, 0
    %97 = vmatprep.subr.bf16.mxu0 %v86
    %98 = vmatpush1.bf16.msra.mxu0 %v85
    %99 = vmatprep.subr.bf16.mxu0 %v88
    %100 = vmatpush1.bf16.msra.mxu0 %v87
    %101 = vmatprep.subr.bf16.mxu0 0
    %102 = vmatpush1.bf16.msra.mxu0 0
    %103 = vmatprep.subr.bf16.mxu0 0
    %104 = vmatpush1.bf16.msra.mxu0 0
    %105 = vmatprep.subr.bf16.mxu0 0
    %106 = vmatpush1.bf16.msra.mxu0 0
    %107 = vmatprep.subr.bf16.mxu0 0
    %108 = vmatpush1.bf16.msra.mxu0 0
    %109 = vmatprep.subr.bf16.mxu0 0
    %110 = vmatpush1.bf16.msra.mxu0 0
    %111 = vmatprep.subr.bf16.mxu0 0
    %112 = vmatpush1.bf16.msra.mxu0 0
    %113 = vmatprep.subr.bf16.mxu0 0
    %114 = vmatpush1.bf16.msra.mxu0 0
    %115 = vmatprep.subr.bf16.mxu0 0
    %116 = vmatpush1.bf16.msra.mxu0 0
    %117 = vmatprep.subr.bf16.mxu0 0
    %118 = vmatpush1.bf16.msra.mxu0 0
    %119 = vmatprep.subr.bf16.mxu0 0
    %120 = vmatpush1.bf16.msra.mxu0 0
    %121 = vmatprep.subr.bf16.mxu0 0
    %122 = vmatpush1.bf16.msra.mxu0 0
    %123 = vmatprep.subr.bf16.mxu0 0
    %124 = vmatpush1.bf16.msra.mxu0 0
    %125 = vmatprep.subr.bf16.mxu0 0
    %126 = vmatpush1.bf16.msra.mxu0 0
    %127 = vmatprep.subr.bf16.mxu0 0
    %128 = vmatpush1.bf16.msra.mxu0 0
    %129 = vmatprep.mubr.bf16.mxu0 0
    %130 = vmatmul.mubr.bf16.gmra.mrb[0].mxu0 %v95
    %v131 = vpop.f32.mrb[0].mxu0
    %v132 = vadd.f32 %v61, %v131
    %v133 = vpop.f32.mrb[0].mxu0
    %v134 = vadd.f32 %v65, %v133
    %v135 = vpop.f32.mrb[0].mxu0
    %v136 = vadd.f32 %v61, %v135
    %v137 = vpop.f32.mrb[0].mxu0
    %v138 = vadd.f32 %v65, %v137
    %139 = vdwg.mxu0
    %v140 = vmax.f32 %v132, 0.0
    %v141 = vmax.f32 %v134, 0.0
    %v142 = vmax.f32 %v136, 0.0
    %v143 = vmax.f32 %v138, 0.0
    %v144 = vpack.c.bf16 %v142, %v140
    %v145 = vpack.c.bf16 %v143, %v141
    %v146 = vld [vmem:[#allocation3] sm:$0xf]
    %v147 = vld [vmem:[#allocation3 + $0x4] sm:$0xf]
    %v148 = vld [vmem:[#allocation3 + $0x8] sm:$0xf]
    %v149 = vld [vmem:[#allocation3 + $0xc] sm:$0xf]
    %v150 = vld [vmem:[#allocation3 + $0x10] sm:$0xf]
    %v151 = vld [vmem:[#allocation3 + $0x14] sm:$0xf]
    %v152 = vld [vmem:[#allocation3 + $0x18] sm:$0xf]
    %v153 = vld [vmem:[#allocation3 + $0x1c] sm:$0xf]
    %v154 = vld [vmem:[#allocation3 + $0x20] sm:$0xf]
    %v155 = vld [vmem:[#allocation3 + $0x24] sm:$0xf]
    %v156 = vld [vmem:[#allocation3 + $0x28] sm:$0xf]
    %v157 = vld [vmem:[#allocation3 + $0x2c] sm:$0xf]
    %v158 = vld [vmem:[#allocation3 + $0x30] sm:$0xf]
    %v159 = vld [vmem:[#allocation3 + $0x34] sm:$0xf]
    %v160 = vld [vmem:[#allocation3 + $0x38] sm:$0xf]
    %v161 = vld [vmem:[#allocation3 + $0x3c] sm:$0xf]
    %v162 = vld [vmem:[#allocation3 + $0x40] sm:$0xf]
    %v163 = vld [vmem:[#allocation3 + $0x44] sm:$0xf]
    %v164 = vld [vmem:[#allocation3 + $0x48] sm:$0xf]
    %v165 = vld [vmem:[#allocation3 + $0x4c] sm:$0xf]
    %v166 = vld [vmem:[#allocation3 + $0x50] sm:$0xf]
    %v167 = vld [vmem:[#allocation3 + $0x54] sm:$0xf]
    %v168 = vld [vmem:[#allocation3 + $0x58] sm:$0xf]
    %v169 = vld [vmem:[#allocation3 + $0x5c] sm:$0xf]
    %v170 = vld [vmem:[#allocation3 + $0x60] sm:$0xf]
    %v171 = vld [vmem:[#allocation3 + $0x64] sm:$0xf]
    %v172 = vld [vmem:[#allocation3 + $0x68] sm:$0xf]
    %v173 = vld [vmem:[#allocation3 + $0x6c] sm:$0xf]
    %v174 = vld [vmem:[#allocation3 + $0x70] sm:$0xf]
    %v175 = vld [vmem:[#allocation3 + $0x74] sm:$0xf]
    %v176 = vld [vmem:[#allocation3 + $0x78] sm:$0xf]
    %v177 = vld [vmem:[#allocation3 + $0x7c] sm:$0xf]
    %v178 = vld [vmem:[%s4] sm:$0x1]
    %v180 = vlaneseq
    %v181 = vshrl.u32 %v180, 7
    %v182 = vsub.s32 0, %v181
    %v183 = vrot.slane %v178, %v182
    %v217 = vunpack.c.l.b16 %v146
    %v218 = vunpack.c.l.b16 %v147
    %v219 = vunpack.c.l.b16 %v148
    %v220 = vunpack.c.l.b16 %v149
    %v221 = vunpack.c.l.b16 %v150
    %v222 = vunpack.c.l.b16 %v151
    %v223 = vunpack.c.l.b16 %v152
    %v224 = vunpack.c.l.b16 %v153
    %v225 = vunpack.c.l.b16 %v154
    %v226 = vunpack.c.l.b16 %v155
    %v227 = vunpack.c.l.b16 %v156
    %v228 = vunpack.c.l.b16 %v157
    %v229 = vunpack.c.l.b16 %v158
    %v230 = vunpack.c.l.b16 %v159
    %v231 = vunpack.c.l.b16 %v160
    %v232 = vunpack.c.l.b16 %v161
    %v233 = vunpack.c.l.b16 %v162
    %v234 = vunpack.c.l.b16 %v163
    %v235 = vunpack.c.l.b16 %v164
    %v236 = vunpack.c.l.b16 %v165
    %v237 = vunpack.c.l.b16 %v166
    %v238 = vunpack.c.l.b16 %v167
    %v239 = vunpack.c.l.b16 %v168
    %v240 = vunpack.c.l.b16 %v169
    %v241 = vunpack.c.l.b16 %v170
    %v242 = vunpack.c.l.b16 %v171
    %v243 = vunpack.c.l.b16 %v172
    %v244 = vunpack.c.l.b16 %v173
    %v245 = vunpack.c.l.b16 %v174
    %v246 = vunpack.c.l.b16 %v175
    %v247 = vunpack.c.l.b16 %v176
    %v248 = vunpack.c.l.b16 %v177
    %v249 = vpack.c.b16 %v218, %v217
    %v250 = vpack.c.b16 %v220, %v219
    %v251 = vpack.c.b16 %v222, %v221
    %v252 = vpack.c.b16 %v224, %v223
    %v253 = vpack.c.b16 %v226, %v225
    %v254 = vpack.c.b16 %v228, %v227
    %v255 = vpack.c.b16 %v230, %v229
    %v256 = vpack.c.b16 %v232, %v231
    %v257 = vpack.c.b16 %v234, %v233
    %v258 = vpack.c.b16 %v236, %v235
    %v259 = vpack.c.b16 %v238, %v237
    %v260 = vpack.c.b16 %v240, %v239
    %v261 = vpack.c.b16 %v242, %v241
    %v262 = vpack.c.b16 %v244, %v243
    %v263 = vpack.c.b16 %v246, %v245
    %v264 = vpack.c.b16 %v248, %v247
    %281 = vmatprep.subr.bf16.mxu0 0
    %282 = vmatpush1.bf16.msra.mxu0 %v249
    %283 = vmatprep.subr.bf16.mxu0 0
    %284 = vmatpush1.bf16.msra.mxu0 %v250
    %285 = vmatprep.subr.bf16.mxu0 0
    %286 = vmatpush1.bf16.msra.mxu0 %v251
    %287 = vmatprep.subr.bf16.mxu0 0
    %288 = vmatpush1.bf16.msra.mxu0 %v252
    %289 = vmatprep.subr.bf16.mxu0 0
    %290 = vmatpush1.bf16.msra.mxu0 %v253
    %291 = vmatprep.subr.bf16.mxu0 0
    %292 = vmatpush1.bf16.msra.mxu0 %v254
    %293 = vmatprep.subr.bf16.mxu0 0
    %294 = vmatpush1.bf16.msra.mxu0 %v255
    %295 = vmatprep.subr.bf16.mxu0 0
    %296 = vmatpush1.bf16.msra.mxu0 %v256
    %297 = vmatprep.subr.bf16.mxu0 0
    %298 = vmatpush1.bf16.msra.mxu0 %v257
    %299 = vmatprep.subr.bf16.mxu0 0
    %300 = vmatpush1.bf16.msra.mxu0 %v258
    %301 = vmatprep.subr.bf16.mxu0 0
    %302 = vmatpush1.bf16.msra.mxu0 %v259
    %303 = vmatprep.subr.bf16.mxu0 0
    %304 = vmatpush1.bf16.msra.mxu0 %v260
    %305 = vmatprep.subr.bf16.mxu0 0
    %306 = vmatpush1.bf16.msra.mxu0 %v261
    %307 = vmatprep.subr.bf16.mxu0 0
    %308 = vmatpush1.bf16.msra.mxu0 %v262
    %309 = vmatprep.subr.bf16.mxu0 0
    %310 = vmatpush1.bf16.msra.mxu0 %v263
    %311 = vmatprep.subr.bf16.mxu0 0
    %312 = vmatpush1.bf16.msra.mxu0 %v264
    %313 = vmatprep.mubr.bf16.mxu0 %v145
    %314 = vmatmul.mubr.bf16.gmra.mrb[0].mxu0 %v144
    %v315 = vpop.f32.mrb[0].mxu0
    %v316 = vadd.f32 %v183, %v315
    %v317 = vpop.f32.mrb[0].mxu0
    %v318 = vpop.f32.mrb[0].mxu0
    %v319 = vadd.f32 %v183, %v318
    %v320 = vpop.f32.mrb[0].mxu0
    %321 = vdwg.mxu0
    %v322 = vmax.f32 %v316, 0.0
    %v323 = vmax.f32 %v319, 0.0
    %v324 = vpack.c.bf16 %v323, %v322
    %v325 = vld [vmem:[%s5] sm:$0xf]
    %v326 = vld [vmem:[%s5 + $0x4] sm:$0xf]
    %v327 = vld [vmem:[%s5 + $0x8] sm:$0xf]
    %v328 = vld [vmem:[%s5 + $0xc] sm:$0xf]
    %v329 = vld [vmem:[%s5 + $0x10] sm:$0xf]
    %v330 = vld [vmem:[%s5 + $0x14] sm:$0xf]
    %v331 = vld [vmem:[%s5 + $0x18] sm:$0xf]
    %v332 = vld [vmem:[%s5 + $0x1c] sm:$0xf]
    %v333 = vld [vmem:[%s5 + $0x20] sm:$0xf]
    %v334 = vld [vmem:[%s5 + $0x24] sm:$0xf]
    %v335 = vld [vmem:[%s5 + $0x28] sm:$0xf]
    %v336 = vld [vmem:[%s5 + $0x2c] sm:$0xf]
    %v337 = vld [vmem:[%s5 + $0x30] sm:$0xf]
    %v338 = vld [vmem:[%s5 + $0x34] sm:$0xf]
    %v339 = vld [vmem:[%s5 + $0x38] sm:$0xf]
    %v340 = vld [vmem:[%s5 + $0x3c] sm:$0xf]
    %v341 = vld [vmem:[%s6] sm:$0x1]
    %v343 = vlaneseq
    %v344 = vshrl.u32 %v343, 7
    %v345 = vsub.s32 0, %v344
    %v346 = vrot.slane %v341, %v345
    %v364 = vunpack.c.l.b16 %v325
    %v365 = vunpack.c.l.b16 %v326
    %v366 = vunpack.c.l.b16 %v327
    %v367 = vunpack.c.l.b16 %v328
    %v368 = vunpack.c.l.b16 %v329
    %v369 = vunpack.c.l.b16 %v330
    %v370 = vunpack.c.l.b16 %v331
    %v371 = vunpack.c.l.b16 %v332
    %v372 = vunpack.c.l.b16 %v333
    %v373 = vunpack.c.l.b16 %v334
    %v374 = vunpack.c.l.b16 %v335
    %v375 = vunpack.c.l.b16 %v336
    %v376 = vunpack.c.l.b16 %v337
    %v377 = vunpack.c.l.b16 %v338
    %v378 = vunpack.c.l.b16 %v339
    %v379 = vunpack.c.l.b16 %v340
    %v380 = vpack.c.b16 %v365, %v364
    %v381 = vpack.c.b16 %v367, %v366
    %v382 = vpack.c.b16 %v369, %v368
    %v383 = vpack.c.b16 %v371, %v370
    %v384 = vpack.c.b16 %v373, %v372
    %v385 = vpack.c.b16 %v375, %v374
    %v386 = vpack.c.b16 %v377, %v376
    %v387 = vpack.c.b16 %v379, %v378
    %396 = vmatprep.subr.bf16.mxu0 0
    %397 = vmatpush1.bf16.msra.mxu0 %v380
    %398 = vmatprep.subr.bf16.mxu0 0
    %399 = vmatpush1.bf16.msra.mxu0 %v381
    %400 = vmatprep.subr.bf16.mxu0 0
    %401 = vmatpush1.bf16.msra.mxu0 %v382
    %402 = vmatprep.subr.bf16.mxu0 0
    %403 = vmatpush1.bf16.msra.mxu0 %v383
    %404 = vmatprep.subr.bf16.mxu0 0
    %405 = vmatpush1.bf16.msra.mxu0 %v384
    %406 = vmatprep.subr.bf16.mxu0 0
    %407 = vmatpush1.bf16.msra.mxu0 %v385
    %408 = vmatprep.subr.bf16.mxu0 0
    %409 = vmatpush1.bf16.msra.mxu0 %v386
    %410 = vmatprep.subr.bf16.mxu0 0
    %411 = vmatpush1.bf16.msra.mxu0 %v387
    %412 = vmatprep.subr.bf16.mxu0 0
    %413 = vmatpush1.bf16.msra.mxu0 0
    %414 = vmatprep.subr.bf16.mxu0 0
    %415 = vmatpush1.bf16.msra.mxu0 0
    %416 = vmatprep.subr.bf16.mxu0 0
    %417 = vmatpush1.bf16.msra.mxu0 0
    %418 = vmatprep.subr.bf16.mxu0 0
    %419 = vmatpush1.bf16.msra.mxu0 0
    %420 = vmatprep.subr.bf16.mxu0 0
    %421 = vmatpush1.bf16.msra.mxu0 0
    %422 = vmatprep.subr.bf16.mxu0 0
    %423 = vmatpush1.bf16.msra.mxu0 0
    %424 = vmatprep.subr.bf16.mxu0 0
    %425 = vmatpush1.bf16.msra.mxu0 0
    %426 = vmatprep.subr.bf16.mxu0 0
    %427 = vmatpush1.bf16.msra.mxu0 0
    %428 = vmatprep.mubr.bf16.mxu0 0
    %429 = vmatmul.mubr.bf16.gmra.mrb[0].mxu0 %v324
    %v430 = vpop.f32.mrb[0].mxu0
    %v431 = vadd.f32 %v346, %v430
    %v432 = vpop.f32.mrb[0].mxu0
    %v433 = vpop.f32.mrb[0].mxu0
    %v434 = vadd.f32 %v346, %v433
    %v435 = vpop.f32.mrb[0].mxu0
    %436 = vdwg.mxu0
    %v437 = vmax.f32 %v431, 0.0
    %v438 = vmax.f32 %v434, 0.0
    %v439 = vld [vmem:[%s7] sm:$0x1]
    %v440 = vpack.c.bf16 %v438, %v437
    %v441 = vld [vmem:[#allocation2] sm:$0x1]
    %443 = vset.pattern.permute.xlu0 0
    %444 = vperm.xlu0 %443, %v441
    %v445 = vpop.permute.xlu0 %444
    %v447 = vlaneseq
    %v448 = vshrl.u32 %v447, 7
    %v449 = vsub.s32 0, %v448
    %v450 = vrot.slane %v445, %v449
    %vm451 = vcmask 523264
    %v453 = vsel %vm451, %v439, 0
    %v456 = vsel %vm451, %v440, 0
    %458 = vmatprep.subr.bf16.mxu0 0
    %459 = vmatpush1.bf16.xpose.msra.mxu0 %v456
    %460 = vmatprep.subr.bf16.mxu0 0
    %461 = vmatpush1.bf16.xpose.msra.mxu0 0
    %462 = vmatprep.subr.bf16.mxu0 0
    %463 = vmatpush1.bf16.xpose.msra.mxu0 0
    %464 = vmatprep.subr.bf16.mxu0 0
    %465 = vmatpush1.bf16.xpose.msra.mxu0 0
    %466 = vmatprep.subr.bf16.mxu0 0
    %467 = vmatpush1.bf16.xpose.msra.mxu0 0
    %468 = vmatprep.subr.bf16.mxu0 0
    %469 = vmatpush1.bf16.xpose.msra.mxu0 0
    %470 = vmatprep.subr.bf16.mxu0 0
    %471 = vmatpush1.bf16.xpose.msra.mxu0 0
    %472 = vmatprep.subr.bf16.mxu0 0
    %473 = vmatpush1.bf16.xpose.msra.mxu0 0
    %474 = vmatprep.subr.bf16.mxu0 0
    %475 = vmatpush1.bf16.xpose.msra.mxu0 0
    %476 = vmatprep.subr.bf16.mxu0 0
    %477 = vmatpush1.bf16.xpose.msra.mxu0 0
    %478 = vmatprep.subr.bf16.mxu0 0
    %479 = vmatpush1.bf16.xpose.msra.mxu0 0
    %480 = vmatprep.subr.bf16.mxu0 0
    %481 = vmatpush1.bf16.xpose.msra.mxu0 0
    %482 = vmatprep.subr.bf16.mxu0 0
    %483 = vmatpush1.bf16.xpose.msra.mxu0 0
    %484 = vmatprep.subr.bf16.mxu0 0
    %485 = vmatpush1.bf16.xpose.msra.mxu0 0
    %486 = vmatprep.subr.bf16.mxu0 0
    %487 = vmatpush1.bf16.xpose.msra.mxu0 0
    %488 = vmatprep.subr.bf16.mxu0 0
    %489 = vmatpush1.bf16.xpose.msra.mxu0 0
    %490 = vmatprep.mubr.bf16.mxu0 0
    %491 = vmatmul.mubr.bf16.gmra.mrb[0].mxu0 %v453
    %v492 = vpop.f32.mrb[0].mxu0
    %v493 = vadd.f32 %v450, %v492
    %v494 = vpop.f32.mrb[0].mxu0
    %v495 = vpop.f32.mrb[0].mxu0
    %v496 = vpop.f32.mrb[0].mxu0
    %497 = vdwg.mxu0
    %vm498 = vcmask 122880
    %499 = vst.msk [vmem:[#allocation6] sm:$0x1] %vm498, %v493
    // Predicated region
    $region42: #{tpu_custom_call.1} parent=1 // pred_check
      _
    $region43: #{tpu_custom_call.1} parent=1 // pred_check_branch
      %501 = sbr.rel (0) target = $region45
    $region44: #{tpu_custom_call.1} parent=1 // pred_region
      %s503 = ssub.s32 16, 16
      %504 = vsyncadd [#allocation5], %s503
      %s506 = sshll.u32 [#allocation6], 4
      %s507 = int_to_ptr.vmem [resolvable:$true] %s506
      %509 = dma.vmem_to_hbm [thread:$0]  %s507, 16, %s9, [#allocation5]
    $region45: #{tpu_custom_call.1} parent=1 // pred_fallthru
      _
    // Predicated region
    $region46: #{tpu_custom_call.1} parent=1 // pred_check
      _
    $region47: #{tpu_custom_call.1} parent=1 // pred_check_branch
      %511 = sbr.rel (0) target = $region49
    $region48: #{tpu_custom_call.1} parent=1 // pred_region
      %512 = dma.done [#allocation5], 16
    $region49: #{tpu_custom_call.1} parent=1 // pred_fallthru
      _
    %513 = vsyncpa [#allocation4], 1
    %514 = vsyncpa [#allocation5], 1

</llo_original>
